<compile_context>
chip_gen: v5e
topology: v5e:2x2
jax: 0.10.0
libtpu: 0.0.40
codegen_flags: <defaults>
</compile_context>

<pallas_src>
import functools
import math

import jax
import jax.numpy as jnp
from jax.experimental import pallas as pl
from jax.experimental.pallas import tpu as pltpu


def _conv_bin_kernel(x_ref, w_ref, o_ref, *, kh_size, kw_size, concat_im2col):
    """One (batch, O-tile, row-tile) grid step.

    x_ref: (1, H_pad, W, C)    activations (NHWC), already in the MXU dtype
    w_ref: (KH*KW*C, TO)       binarized +/-1 weights, lane-dense on O
    o_ref: (1, THo*Wo, TO)     flattened output row tile, lane-dense on O
    """
    _, _, w_img, c = x_ref.shape
    k_total, t_o = w_ref.shape
    _, rows, _ = o_ref.shape
    wo = w_img - kw_size + 1
    t_ho = rows // wo

    r = pl.program_id(2)              # row-tile index (innermost grid axis)
    row0 = r * t_ho                   # first output row of this tile

    wb = w_ref[...]                   # already +/-1 in the MXU dtype (no cast)

    if concat_im2col:
        # Small C: build the (rows, KH*KW*C) im2col patch in the MXU dtype and
        # contract it in a single MXU matmul (amortizes MXU K padding).
        slabs = []
        for kh in range(kh_size):
            band = x_ref[0, pl.ds(row0 + kh, t_ho), :, :]        # (t_ho, W, C)
            for kw in range(kw_size):
                slabs.append(band[:, kw:kw + wo, :])
        patch = jnp.concatenate(slabs, axis=-1).reshape(rows, k_total)
        out = jnp.dot(patch, wb, preferred_element_type=jnp.float32)
    else:
        # Large C (>= 128 lanes): skip the patch materialization and
        # accumulate the KH*KW per-tap matmuls into an f32 tile instead.
        out = jnp.zeros((rows, t_o), jnp.float32)
        tap = 0
        for kh in range(kh_size):
            band = x_ref[0, pl.ds(row0 + kh, t_ho), :, :]        # (t_ho, W, C)
            for kw in range(kw_size):
                s = band[:, kw:kw + wo, :].reshape(rows, c)
                out = out + jnp.dot(s, wb[tap * c:(tap + 1) * c, :],
                                    preferred_element_type=jnp.float32)
                tap += 1

    o_ref[...] = out.reshape(1, rows, t_o).astype(o_ref.dtype)


def _pick_tile_ho(ho, wo, target_rows=1024):
    """Output-row tile: tile_ho * Wo is a multiple of 8 and ~<= target rows."""
    g = 8 // math.gcd(wo, 8)                    # min tile s.t. tile_ho*wo % 8 == 0
    t = max(g, (target_rows // wo) // g * g)    # largest aligned tile under budget
    ho_g = ((ho + g - 1) // g) * g              # no point tiling past (padded) Ho
    return min(t, ho_g)


def conv_bin_layer(x_nchw, weights_oihw, *, tile_ho=None, tile_o=None,
                   mxu_dtype=jnp.bfloat16):
    """Forward pass of ConvBinLayer. x: (N,C,H,W), weights: (O,C,KH,KW).

    mxu_dtype=bfloat16 (default) uses the full-rate MXU path; weights are
    exact +/-1 in bf16, so only the activation rounding changes numerics.
    Pass mxu_dtype=jnp.float32 for closer parity with the f32 reference.
    """
    N, C, H, W = x_nchw.shape
    O, Cw, KH, KW = weights_oihw.shape
    assert Cw == C
    Ho, Wo = H - KH + 1, W - KW + 1
    K = KH * KW * C
    out_dtype = x_nchw.dtype

    # Lane-dense output channels. 256 fills the 256-wide v6e/v7x MXU when O is
    # large; a single 128 tile is right for small O (and matches v5e's MXU).
    if tile_o is None:
        tile_o = 256 if O > 128 else 128
    O_pad = pl.cdiv(O, tile_o) * tile_o

    # Output rows are flattened to Ho*Wo so stores are dense unmasked vst (no
    # per-step (rows, O) -> (Ho, Wo, O) reshape in the kernel).
    if tile_ho is None:
        tile_ho = _pick_tile_ho(Ho, Wo)
    n_row_tiles = pl.cdiv(Ho, tile_ho)
    Ho_pad = n_row_tiles * tile_ho
    rows = tile_ho * Wo
    assert rows % 8 == 0 or n_row_tiles == 1, (
        "tile_ho * Wo must be a multiple of 8 (or use a single row tile)")

    # ---- glue: layout changes + one-time weight binarization (no hot path) --
    # Activations: NCHW -> NHWC, cast once to the MXU dtype, zero-pad H so
    # every (padded) output row tile's input window is in range.
    H_pad = Ho_pad + KH - 1
    x_nhwc = jnp.transpose(x_nchw, (0, 2, 3, 1)).astype(mxu_dtype)
    if H_pad > H:
        x_nhwc = jnp.pad(x_nhwc, ((0, 0), (0, H_pad - H), (0, 0), (0, 0)))

    # binarize11: w >= 0 -> +1, w < 0 -> -1 (exact in bf16 and f32). Stored
    # directly in the MXU dtype, pre-reshaped to the im2col layout, O-padded.
    w_hwio = jnp.transpose(weights_oihw, (2, 3, 1, 0))        # OIHW -> HWIO
    wb2d = jnp.where(w_hwio >= 0, 1.0, -1.0).astype(mxu_dtype).reshape(K, O)
    wb2d = jnp.pad(wb2d, ((0, 0), (0, O_pad - O)))            # zero-pad O dim

    # Row-tile axis innermost so the weight tile's block index is constant
    # across it (weights stay resident); x is resident across (ot, r) too.
    grid = (N, O_pad // tile_o, n_row_tiles)

    # Explicit VMEM budget: double-buffered x / w / out blocks + im2col patch
    # + f32 accumulator, with headroom; clamped to [32, 64] MiB so it is safe
    # on v5e/v6e (128 MiB physical) and v7x (64 MiB physical).
    a_bytes = jnp.dtype(mxu_dtype).itemsize
    o_bytes = jnp.dtype(out_dtype).itemsize
    vmem_est = (2 * H_pad * W * C * a_bytes          # x block (double-buffered)
                + 2 * K * tile_o * a_bytes           # weight tile
                + 2 * rows * tile_o * o_bytes        # output tile
                + 2 * rows * K * a_bytes             # im2col patch + slabs
                + rows * tile_o * 4)                 # f32 accumulator
    vmem_limit = min(max(int(1.5 * vmem_est) + (4 << 20), 32 << 20), 64 << 20)

    kernel = functools.partial(_conv_bin_kernel, kh_size=KH, kw_size=KW,
                               concat_im2col=(C < 128))

    out_flat = pl.pallas_call(
        kernel,
        out_shape=jax.ShapeDtypeStruct((N, Ho_pad * Wo, O_pad), out_dtype),
        grid_spec=pltpu.PrefetchScalarGridSpec(
            num_scalar_prefetch=0,
            grid=grid,
            in_specs=[
                # Full (padded) image per batch element; constant block index
                # across (ot, r) keeps it resident (no halo bookkeeping).
                # TODO(synk): row-band / single-buffer the x block via manual
                # DMA for very large images on v7x (64 MiB VMEM).
                pl.BlockSpec((1, H_pad, W, C), lambda n, ot, r: (n, 0, 0, 0)),
                pl.BlockSpec((K, tile_o), lambda n, ot, r: (0, ot)),
            ],
            out_specs=pl.BlockSpec((1, rows, tile_o),
                                   lambda n, ot, r: (n, r, ot)),
        ),
        compiler_params=pltpu.CompilerParams(
            # Every grid point writes a disjoint output block -> fully
            # parallel; lets v7x shard work across its 2 TensorCores.
            dimension_semantics=("parallel", "parallel", "parallel"),
            vmem_limit_bytes=vmem_limit),
    )(x_nhwc, wb2d)

    # Drop row / O padding, un-flatten, back to PyTorch NCHW.
    out = out_flat[:, :Ho * Wo, :O].reshape(N, Ho, Wo, O)
    return jnp.transpose(out, (0, 3, 1, 2))


if __name__ == "__main__":
    key = jax.random.PRNGKey(0)
    kx, kw = jax.random.split(key)

    # Small shapes consistent with the module: N=2, C=4, H=W=16, O=8, K=3.
    x = jax.random.normal(kx, (2, 4, 16, 16), dtype=jnp.float32)
    weights = jax.random.normal(kw, (8, 4, 3, 3), dtype=jnp.float32)

    # tile_ho=8 exercises a (2, 1, 2) grid (2 row tiles, padded Ho 14 -> 16).
    f = jax.jit(functools.partial(conv_bin_layer, tile_ho=8))
    y = jax.block_until_ready(f(x, weights))

    # Pure-JAX references (same binarize11 + valid conv2d).
    wb_ref = jnp.where(weights >= 0, 1.0, -1.0).astype(jnp.float32)

    # Reference with the kernel's bf16 activation quantization (weights are
    # exact +/-1 in bf16, accumulation is f32) -> tight tolerance.
    x_bf = x.astype(jnp.bfloat16).astype(jnp.float32)
    y_ref_bf = jax.lax.conv_general_dilated(
        x_bf, wb_ref, window_strides=(1, 1), padding="VALID",
        dimension_numbers=("NCHW", "OIHW", "NCHW"))

    # Full f32 reference (module semantics) -> only bf16 activation rounding.
    y_ref_f32 = jax.lax.conv_general_dilated(
        x, wb_ref, window_strides=(1, 1), padding="VALID",
        dimension_numbers=("NCHW", "OIHW", "NCHW"))

    assert y.shape == (2, 8, 14, 14)
    assert jnp.allclose(y, y_ref_bf, atol=1e-3, rtol=1e-3)
    assert jnp.allclose(y, y_ref_f32, atol=0.3, rtol=0.05)

    print("KERNEL_OK")
</pallas_src>

<mosaic_0001>
module attributes {stable_mosaic.version = 11 : i64} {
  func.func @_conv_bin_kernel(%arg0: i32, %arg1: i32, %arg2: i32, %arg3: memref<1x18x16x4xbf16, #tpu.memory_space<vmem>>, %arg4: memref<36x128xbf16, #tpu.memory_space<vmem>>, %arg5: memref<1x112x128xf32, #tpu.memory_space<vmem>>) attributes {dimension_semantics = [#tpu.dimension_semantics<parallel>, #tpu.dimension_semantics<parallel>, #tpu.dimension_semantics<parallel>], iteration_bounds = array<i64: 2, 1, 2>, scalar_prefetch = 0 : i64, scratch_operands = 0 : i64, tpu.core_type = #tpu.core_type<tc>, window_params = [{transform_indices = @transform_0, window_bounds = array<i64: 1, 18, 16, 4>}, {transform_indices = @transform_1, window_bounds = array<i64: 36, 128>}, {transform_indices = @transform_2, window_bounds = array<i64: 1, 112, 128>}]} {
    %c8_i32 = arith.constant 8 : i32
    %0 = arith.muli %arg2, %c8_i32 : i32
    %c0 = arith.constant 0 : index
    %c0_0 = arith.constant 0 : index
    %1 = vector.load %arg4[%c0, %c0_0] : memref<36x128xbf16, #tpu.memory_space<vmem>>, vector<36x128xbf16>
    %c0_i32 = arith.constant 0 : i32
    %2 = arith.addi %0, %c0_i32 : i32
    %c0_1 = arith.constant 0 : index
    %3 = arith.index_cast %2 : i32 to index
    %c0_2 = arith.constant 0 : index
    %c0_3 = arith.constant 0 : index
    %4 = vector.load %arg3[%c0_1, %3, %c0_2, %c0_3] : memref<1x18x16x4xbf16, #tpu.memory_space<vmem>>, vector<1x8x16x4xbf16>
    %5 = vector.shape_cast %4 : vector<1x8x16x4xbf16> to vector<8x16x4xbf16>
    %6 = vector.extract_strided_slice %5 {offsets = [0, 0, 0], sizes = [8, 14, 4], strides = [1, 1, 1]} : vector<8x16x4xbf16> to vector<8x14x4xbf16>
    %7 = vector.extract_strided_slice %5 {offsets = [0, 1, 0], sizes = [8, 14, 4], strides = [1, 1, 1]} : vector<8x16x4xbf16> to vector<8x14x4xbf16>
    %8 = vector.extract_strided_slice %5 {offsets = [0, 2, 0], sizes = [8, 14, 4], strides = [1, 1, 1]} : vector<8x16x4xbf16> to vector<8x14x4xbf16>
    %c1_i32 = arith.constant 1 : i32
    %9 = arith.addi %0, %c1_i32 : i32
    %c0_4 = arith.constant 0 : index
    %10 = arith.index_cast %9 : i32 to index
    %c0_5 = arith.constant 0 : index
    %c0_6 = arith.constant 0 : index
    %11 = vector.load %arg3[%c0_4, %10, %c0_5, %c0_6] : memref<1x18x16x4xbf16, #tpu.memory_space<vmem>>, vector<1x8x16x4xbf16>
    %12 = vector.shape_cast %11 : vector<1x8x16x4xbf16> to vector<8x16x4xbf16>
    %13 = vector.extract_strided_slice %12 {offsets = [0, 0, 0], sizes = [8, 14, 4], strides = [1, 1, 1]} : vector<8x16x4xbf16> to vector<8x14x4xbf16>
    %14 = vector.extract_strided_slice %12 {offsets = [0, 1, 0], sizes = [8, 14, 4], strides = [1, 1, 1]} : vector<8x16x4xbf16> to vector<8x14x4xbf16>
    %15 = vector.extract_strided_slice %12 {offsets = [0, 2, 0], sizes = [8, 14, 4], strides = [1, 1, 1]} : vector<8x16x4xbf16> to vector<8x14x4xbf16>
    %c2_i32 = arith.constant 2 : i32
    %16 = arith.addi %0, %c2_i32 : i32
    %c0_7 = arith.constant 0 : index
    %17 = arith.index_cast %16 : i32 to index
    %c0_8 = arith.constant 0 : index
    %c0_9 = arith.constant 0 : index
    %18 = vector.load %arg3[%c0_7, %17, %c0_8, %c0_9] : memref<1x18x16x4xbf16, #tpu.memory_space<vmem>>, vector<1x8x16x4xbf16>
    %19 = vector.shape_cast %18 : vector<1x8x16x4xbf16> to vector<8x16x4xbf16>
    %20 = vector.extract_strided_slice %19 {offsets = [0, 0, 0], sizes = [8, 14, 4], strides = [1, 1, 1]} : vector<8x16x4xbf16> to vector<8x14x4xbf16>
    %21 = vector.extract_strided_slice %19 {offsets = [0, 1, 0], sizes = [8, 14, 4], strides = [1, 1, 1]} : vector<8x16x4xbf16> to vector<8x14x4xbf16>
    %22 = vector.extract_strided_slice %19 {offsets = [0, 2, 0], sizes = [8, 14, 4], strides = [1, 1, 1]} : vector<8x16x4xbf16> to vector<8x14x4xbf16>
    %23 = tpu.concatenate %6, %7, %8, %13, %14, %15, %20, %21, %22 in 2 : vector<8x14x4xbf16>, vector<8x14x4xbf16>, vector<8x14x4xbf16>, vector<8x14x4xbf16>, vector<8x14x4xbf16>, vector<8x14x4xbf16>, vector<8x14x4xbf16>, vector<8x14x4xbf16>, vector<8x14x4xbf16> -> vector<8x14x36xbf16>
    %24 = vector.shape_cast %23 : vector<8x14x36xbf16> to vector<112x36xbf16>
    %cst = arith.constant dense<0.000000e+00> : vector<112x128xf32>
    %25 = tpu.matmul %24, %1, %cst {dimension_numbers = #tpu.dot_dimension_numbers<[1], [0], [0], [1], [0, 0, 1, 1], [], []>} : vector<112x36xbf16>, vector<36x128xbf16>, vector<112x128xf32> -> vector<112x128xf32>
    %26 = vector.shape_cast %25 : vector<112x128xf32> to vector<1x112x128xf32>
    %c0_10 = arith.constant 0 : index
    %c0_11 = arith.constant 0 : index
    %c0_12 = arith.constant 0 : index
    %27 = vector.load %arg5[%c0_10, %c0_11, %c0_12] : memref<1x112x128xf32, #tpu.memory_space<vmem>>, vector<1x112x128xf32>
    tpu.vector_store %arg5[%c0_10, %c0_11, %c0_12], %26 {strides = array<i32>} : memref<1x112x128xf32, #tpu.memory_space<vmem>>, vector<1x112x128xf32>,
    return
  }
  func.func @transform_0(%arg0: i32, %arg1: i32, %arg2: i32) -> (i32, i32, i32, i32) {
    %c0_i32 = arith.constant 0 : i32
    %c0_i32_0 = arith.constant 0 : i32
    %c0_i32_1 = arith.constant 0 : i32
    %c0_i32_2 = arith.constant 0 : i32
    return %arg0, %c0_i32, %c0_i32_0, %c0_i32_1 : i32, i32, i32, i32
  }
  func.func @transform_1(%arg0: i32, %arg1: i32, %arg2: i32) -> (i32, i32) {
    %c0_i32 = arith.constant 0 : i32
    %c0_i32_0 = arith.constant 0 : i32
    return %c0_i32, %arg1 : i32, i32
  }
  func.func @transform_2(%arg0: i32, %arg1: i32, %arg2: i32) -> (i32, i32, i32) {
    %c0_i32 = arith.constant 0 : i32
    return %arg0, %arg2, %arg1 : i32, i32, i32
  }
}

</mosaic_0001>

<llo_original>
// kernel: conv_bin_layer.1
$region0: #{conv_bin_layer.1}
  #allocation0 [shape = 'u32[]', space=smem, size = 0x4, offset = 0x4, fixed_abs, tag = 'smem constant byte address 0x4 - core index']
  #allocation1 [shape = 'u32[72,128]{1,0:T(1,128)}', space=vmem, size = 0x9000, scoped, tag = 'internal scratch']
  %s0 = inlined_call_operand.vmem [shape: bf16[2,18,16,4], index: 0, kind: input, shape index: {}]
  %s1 = inlined_call_operand.vmem [shape: bf16[36,128], index: 1, kind: input, shape index: {}]
  %s2 = inlined_call_operand.vmem [shape: f32[2,224,128], index: 2, kind: output, shape index: {}]
  %s3 = sld [smem:[#allocation0]]
  $region41: #{conv_bin_layer.1} parent=0
    _
  %s5 = ssub.s32 1, %s3
  %s6 = scalar_select 0, %s5, %s3
  loop: start=0, step=1, limit=6
  $region2: #{conv_bin_layer.1} parent=0 // loop_pre_header
    _
  $region3: #{conv_bin_layer.1} parent=0 // loop_header
    %s8 = sphi 0, %s12
    %p9 = scmp.ge.s32.totalorder %s8, 6
    %s15 = sphi 0, %s34
    %s16 = sphi 0, %s30
    %s17 = sphi 0, %s26
    %s18 = sphi 0, %s15
    %s19 = sphi 0, %s16
    %s20 = sphi 0, %s17
    %s21 = sphi 0, %s18
    %s22 = sphi 0, %s19
    %s23 = sphi 0, %s20
    %s37 = sphi 0, %s39
    %s40 = sphi 0, %s37
    %s41 = sphi 0, %s40
    %s57 = sphi 0, %s41
    %s63 = sphi 0, %s65
    %s66 = sphi 0, %s63
    %s67 = sphi 0, %s66
    %s83 = sphi 0, %s67
    %s93 = sphi 0, %s95
    %s96 = sphi 0, %s93
    %s97 = sphi 0, %s96
    %s113 = sphi 0, %s97
  $region4: #{conv_bin_layer.1} parent=0 // loop_header_branch
    %11 = sbr.rel (%p9) target = $region8
  $region5: #{conv_bin_layer.1} parent=0 // loop_body
    %s13 = ssub.s32 %s8, 1
    %s14 = ssub.s32 %s8, 2
    %s24 = sadd.s32 1, %s17
    %p25 = scmp.ge.s32.totalorder %s24, 2
    %s26 = scalar_select %p25, 0, %s24
    %s27 = sadd.s32 1, %s16
    %s28 = scalar_select %p25, %s27, %s16
    %p29 = scmp.ge.s32.totalorder %s28, 1
    %s30 = scalar_select %p29, 0, %s28
    %s31 = sadd.s32 1, %s15
    %s32 = scalar_select %p29, %s31, %s15
    %p33 = scmp.ge.s32.totalorder %s32, 2
    %s34 = scalar_select %p33, 0, %s32
    %s35 = ssub.s32 %s15, %s34
    %p36 = scmp.eq.s32.totalorder %s35, 0
    %s38 = sadd.s32 %s37, 1
    %s39 = scalar_select %p36, %s37, %s38
    %p42 = pneg %p36
    %p43 = scmp.eq.s32.totalorder %s8, 3
    %p44 = por %p42, %p43
    %p45 = scmp.ne.s32.totalorder %s37, %s40
    %p46 = scmp.eq.s32.totalorder %s8, 0
    %p47 = por %p45, %p46
    %p48 = scmp.ne.s32.totalorder %s37, %s40
    %p49 = scmp.eq.s32.totalorder %s13, 3
    %p50 = por %p48, %p49
    %p51 = scmp.ne.s32.totalorder %s40, %s41
    %p52 = scmp.eq.s32.totalorder %s13, 0
    %p53 = por %p51, %p52
    %p54 = scmp.ne.s32.totalorder %s40, %s41
    %p55 = scmp.eq.s32.totalorder %s14, 3
    %p56 = por %p54, %p55
    %p58 = scmp.ne.s32.totalorder %s41, %s57
    %p59 = scmp.eq.s32.totalorder %s14, 0
    %p60 = por %p58, %p59
    %s61 = ssub.s32 %s16, %s30
    %p62 = scmp.eq.s32.totalorder %s61, 0
    %s64 = sadd.s32 %s63, 1
    %s65 = scalar_select %p62, %s63, %s64
    %p68 = pneg %p62
    %p69 = scmp.eq.s32.totalorder %s8, 3
    %p70 = por %p68, %p69
    %p71 = scmp.ne.s32.totalorder %s63, %s66
    %p72 = scmp.eq.s32.totalorder %s8, 0
    %p73 = por %p71, %p72
    %p74 = scmp.ne.s32.totalorder %s63, %s66
    %p75 = scmp.eq.s32.totalorder %s13, 3
    %p76 = por %p74, %p75
    %p77 = scmp.ne.s32.totalorder %s66, %s67
    %p78 = scmp.eq.s32.totalorder %s13, 0
    %p79 = por %p77, %p78
    %p80 = scmp.ne.s32.totalorder %s66, %s67
    %p81 = scmp.eq.s32.totalorder %s14, 3
    %p82 = por %p80, %p81
    %p84 = scmp.ne.s32.totalorder %s67, %s83
    %p85 = scmp.eq.s32.totalorder %s14, 0
    %p86 = por %p84, %p85
    %s87 = ssub.s32 %s15, %s34
    %s88 = ssub.s32 %s17, %s26
    %s89 = sor.u32 %s87, %s88
    %s90 = ssub.s32 %s16, %s30
    %s91 = sor.u32 %s89, %s90
    %p92 = scmp.eq.s32.totalorder %s91, 0
    %s94 = sadd.s32 %s93, 1
    %s95 = scalar_select %p92, %s93, %s94
    %p98 = pneg %p92
    %p99 = scmp.eq.s32.totalorder %s8, 3
    %p100 = por %p98, %p99
    %p101 = scmp.ne.s32.totalorder %s93, %s96
    %p102 = scmp.eq.s32.totalorder %s8, 0
    %p103 = por %p101, %p102
    %p104 = scmp.ne.s32.totalorder %s93, %s96
    %p105 = scmp.eq.s32.totalorder %s13, 3
    %p106 = por %p104, %p105
    %p107 = scmp.ne.s32.totalorder %s96, %s97
    %p108 = scmp.eq.s32.totalorder %s13, 0
    %p109 = por %p107, %p108
    %p110 = scmp.ne.s32.totalorder %s96, %s97
    %p111 = scmp.eq.s32.totalorder %s14, 3
    %p112 = por %p110, %p111
    %p114 = scmp.ne.s32.totalorder %s97, %s113
    %p115 = scmp.eq.s32.totalorder %s14, 0
    %p116 = por %p114, %p115
    %p117 = scmp.le.s32.totalorder 1, %s8
    %p118 = scmp.lt.s32.totalorder %s8, 5
    %p119 = pnand %p117, %p118
    %p120 = pneg %p119
    // Predicated region
    $region9: #{conv_bin_layer.1} parent=5 // pred_check
      _
    $region10: #{conv_bin_layer.1} parent=5 // pred_check_branch
      %122 = sbr.rel (%p119) target = $region12
    $region11: #{conv_bin_layer.1} parent=5 // pred_region
      %s123 = ssub.s32 %s8, 1
      // Predicated region
      $region13: #{conv_bin_layer.1} parent=11 // pred_check
        %p124 = pneg %p79
      $region14: #{conv_bin_layer.1} parent=11 // pred_check_branch
        %126 = sbr.rel (%p124) target = $region16
      $region15: #{conv_bin_layer.1} parent=11 // pred_region
        %p127 = scmp.lt.s32.totalorder %s19, 0
        %s128 = scalar_select %p127, %s19, 0
        %s129 = smul.addr %s128, 4
        %s130 = scalar_lea.vmem %s1, %s129
      $region16: #{conv_bin_layer.1} parent=11 // pred_fallthru
        _
    $region12: #{conv_bin_layer.1} parent=5 // pred_fallthru
      _
    %p131 = scmp.lt.s32.totalorder %s8, 4
    // Predicated region
    $region17: #{conv_bin_layer.1} parent=5 // pred_check
      %p132 = pneg %p131
    $region18: #{conv_bin_layer.1} parent=5 // pred_check_branch
      %134 = sbr.rel (%p132) target = $region20
    $region19: #{conv_bin_layer.1} parent=5 // pred_region
      // Predicated region
      $region21: #{conv_bin_layer.1} parent=19 // pred_check
        %p135 = pneg %p47
      $region22: #{conv_bin_layer.1} parent=19 // pred_check_branch
        %137 = sbr.rel (%p135) target = $region24
      $region23: #{conv_bin_layer.1} parent=19 // pred_region
        %p138 = scmp.lt.s32.totalorder %s15, 1
        %s139 = scalar_select %p138, %s15, 1
        %s140 = smul.addr %s139, 36
        %s141 = smul.addr %s140, 4
        %s142 = scalar_lea.vmem %s0, %s141
      $region24: #{conv_bin_layer.1} parent=19 // pred_fallthru
        _
    $region20: #{conv_bin_layer.1} parent=5 // pred_fallthru
      _
    %p143 = scmp.le.s32.totalorder 1, %s8
    %p144 = scmp.lt.s32.totalorder %s8, 5
    %p145 = pnand %p143, %p144
    %p146 = pneg %p145
    // Predicated region
    $region25: #{conv_bin_layer.1} parent=5 // pred_check
      _
    $region26: #{conv_bin_layer.1} parent=5 // pred_check_branch
      %148 = sbr.rel (%p145) target = $region28
    $region27: #{conv_bin_layer.1} parent=5 // pred_region
      %s149 = ssub.s32 %s8, 1
      %p150 = scmp.lt.s32.totalorder %s18, 1
      %s151 = scalar_select %p150, %s18, 1
      %s152 = smul.addr %s151, 36
      %s153 = smul.addr %s152, 4
      %s154 = scalar_lea.vmem %s0, %s153
      %p155 = pneg %p53
      %p156 = pneg %p50
      %p157 = scmp.lt.s32.totalorder %s19, 0
      %s158 = scalar_select %p157, %s19, 0
      %s159 = smul.addr %s158, 4
      %s160 = scalar_lea.vmem %s1, %s159
      %p161 = pneg %p79
      %p162 = pneg %p76
      %p163 = pneg %p109
      %p164 = pneg %p106
      %s165 = smul.u32 14, %s20
      %p166 = scmp.lt.s32.totalorder %s18, 1
      %s167 = scalar_select %p166, %s18, 1
      %p168 = scmp.lt.s32.totalorder %s165, 27
      %s169 = scalar_select %p168, %s165, 27
      %p170 = scmp.lt.s32.totalorder %s19, 0
      %s171 = scalar_select %p170, %s19, 0
      %s172 = sadd.s32 %s171, %s169
      %s173 = smul.addr %s167, 28
      %s174 = sadd.s32 %s172, %s173
      %s175 = smul.addr %s174, 8
      %s176 = scalar_lea.vmem %s2, %s175
      %p177 = scmp.lt.s32.totalorder %s18, 1
      %s178 = scalar_select %p177, %s18, 1
      %s179 = smul.addr %s178, 36
      %s180 = smul.addr %s179, 4
      %s181 = scalar_lea.vmem %s0, %s180
      %p182 = scmp.lt.s32.totalorder %s19, 0
      %s183 = scalar_select %p182, %s19, 0
      %s184 = smul.addr %s183, 4
      %s185 = scalar_lea.vmem %s1, %s184
      %s186 = smul.u32 14, %s20
      %p187 = scmp.lt.s32.totalorder %s18, 1
      %s188 = scalar_select %p187, %s18, 1
      %p189 = scmp.lt.s32.totalorder %s186, 27
      %s190 = scalar_select %p189, %s186, 27
      %p191 = scmp.lt.s32.totalorder %s19, 0
      %s192 = scalar_select %p191, %s19, 0
      %s193 = sadd.s32 %s192, %s190
      %s194 = smul.addr %s188, 28
      %s195 = sadd.s32 %s193, %s194
      %s196 = smul.addr %s195, 8
      %s197 = scalar_lea.vmem %s2, %s196
      %s198 = smul.u32 14, %s20
      %s200 = smul.u32 %s20, 8
      %v201 = vld [vmem:[%s185] sm:$0xf]
      %v202 = vld [vmem:[%s185 + $0x4] sm:$0xf]
      %v203 = vld [vmem:[%s185 + $0x8] sm:$0xf]
      %v204 = vld [vmem:[%s185 + $0xc] sm:$0xf]
      %v205 = vld [vmem:[%s185 + $0x10] sm:$0x3]
      %s206 = smul.u32 %s200, 2
      %s207 = smul.addr %s206, 4
      %s208 = scalar_lea.vmem %s181, %s207
      %v209 = vld [vmem:[%s208] sm:$0xf]
      %v210 = vld [vmem:[%s208 + $0x4] sm:$0xf]
      %v211 = vld [vmem:[%s208 + $0x8] sm:$0xf]
      %v212 = vld [vmem:[%s208 + $0xc] sm:$0xf]
      %v213 = vld [vmem:[%s208 + $0x10] sm:$0xf]
      %v214 = vld [vmem:[%s208 + $0x14] sm:$0xf]
      %v215 = vld [vmem:[%s208 + $0x18] sm:$0xf]
      %v216 = vld [vmem:[%s208 + $0x1c] sm:$0xf]
      %v217 = vld [vmem:[%s208 + $0x20] sm:$0xf]
      %v218 = vld [vmem:[%s208 + $0x24] sm:$0xf]
      %v219 = vld [vmem:[%s208 + $0x28] sm:$0xf]
      %v220 = vld [vmem:[%s208 + $0x2c] sm:$0xf]
      %v221 = vld [vmem:[%s208 + $0x30] sm:$0xf]
      %v222 = vld [vmem:[%s208 + $0x34] sm:$0xf]
      %v223 = vld [vmem:[%s208 + $0x38] sm:$0xf]
      %v224 = vld [vmem:[%s208 + $0x3c] sm:$0xf]
      %s225 = sadd.s32 %s200, 1
      %s226 = smul.u32 %s225, 2
      %s227 = smul.addr %s226, 4
      %s228 = scalar_lea.vmem %s181, %s227
      %v229 = vld [vmem:[%s228] sm:$0xf]
      %v230 = vld [vmem:[%s228 + $0x4] sm:$0xf]
      %v231 = vld [vmem:[%s228 + $0x8] sm:$0xf]
      %v232 = vld [vmem:[%s228 + $0xc] sm:$0xf]
      %v233 = vld [vmem:[%s228 + $0x10] sm:$0xf]
      %v234 = vld [vmem:[%s228 + $0x14] sm:$0xf]
      %v235 = vld [vmem:[%s228 + $0x18] sm:$0xf]
      %v236 = vld [vmem:[%s228 + $0x1c] sm:$0xf]
      %v237 = vld [vmem:[%s228 + $0x20] sm:$0xf]
      %v238 = vld [vmem:[%s228 + $0x24] sm:$0xf]
      %v239 = vld [vmem:[%s228 + $0x28] sm:$0xf]
      %v240 = vld [vmem:[%s228 + $0x2c] sm:$0xf]
      %v241 = vld [vmem:[%s228 + $0x30] sm:$0xf]
      %v242 = vld [vmem:[%s228 + $0x34] sm:$0xf]
      %v243 = vld [vmem:[%s228 + $0x38] sm:$0xf]
      %v244 = vld [vmem:[%s228 + $0x3c] sm:$0xf]
      %s245 = sadd.s32 %s200, 2
      %s246 = smul.u32 %s245, 2
      %s247 = smul.addr %s246, 4
      %s248 = scalar_lea.vmem %s181, %s247
      %v249 = vld [vmem:[%s248] sm:$0xf]
      %v250 = vld [vmem:[%s248 + $0x4] sm:$0xf]
      %v251 = vld [vmem:[%s248 + $0x8] sm:$0xf]
      %v252 = vld [vmem:[%s248 + $0xc] sm:$0xf]
      %v253 = vld [vmem:[%s248 + $0x10] sm:$0xf]
      %v254 = vld [vmem:[%s248 + $0x14] sm:$0xf]
      %v255 = vld [vmem:[%s248 + $0x18] sm:$0xf]
      %v256 = vld [vmem:[%s248 + $0x1c] sm:$0xf]
      %v257 = vld [vmem:[%s248 + $0x20] sm:$0xf]
      %v258 = vld [vmem:[%s248 + $0x24] sm:$0xf]
      %v259 = vld [vmem:[%s248 + $0x28] sm:$0xf]
      %v260 = vld [vmem:[%s248 + $0x2c] sm:$0xf]
      %v261 = vld [vmem:[%s248 + $0x30] sm:$0xf]
      %v262 = vld [vmem:[%s248 + $0x34] sm:$0xf]
      %v263 = vld [vmem:[%s248 + $0x38] sm:$0xf]
      %v264 = vld [vmem:[%s248 + $0x3c] sm:$0xf]
      %v281 = vunpack.c.l.b16 %v209
      %v282 = vunpack.c.l.b16 %v210
      %v283 = vunpack.c.l.b16 %v211
      %v284 = vunpack.c.l.b16 %v212
      %v285 = vunpack.c.l.b16 %v213
      %v286 = vunpack.c.l.b16 %v214
      %v287 = vunpack.c.l.b16 %v215
      %v288 = vunpack.c.l.b16 %v216
      %v289 = vunpack.c.l.b16 %v217
      %v290 = vunpack.c.l.b16 %v218
      %v291 = vunpack.c.l.b16 %v219
      %v292 = vunpack.c.l.b16 %v220
      %v293 = vunpack.c.l.b16 %v221
      %v294 = vunpack.c.l.b16 %v222
      %v295 = vunpack.c.l.b16 %v223
      %v296 = vunpack.c.l.b16 %v224
      %v297 = vpack.c.b16 %v282, %v281
      %v298 = vpack.c.b16 %v284, %v283
      %v299 = vpack.c.b16 %v286, %v285
      %v300 = vpack.c.b16 %v288, %v287
      %v301 = vpack.c.b16 %v290, %v289
      %v302 = vpack.c.b16 %v292, %v291
      %v303 = vpack.c.b16 %v294, %v293
      %v304 = vpack.c.b16 %v296, %v295
      %v306 = vshrl.u32 %v297, 16
      %v308 = vshll.u32 %v297, 16
      %v310 = vrot.slane %v308, 1
      %v311 = vor.u32 %v306, %v310
      %v313 = vshrl.u32 %v298, 16
      %v315 = vshll.u32 %v298, 16
      %v317 = vrot.slane %v315, 1
      %v318 = vor.u32 %v313, %v317
      %v320 = vshrl.u32 %v299, 16
      %v322 = vshll.u32 %v299, 16
      %v324 = vrot.slane %v322, 1
      %v325 = vor.u32 %v320, %v324
      %v327 = vshrl.u32 %v300, 16
      %v329 = vshll.u32 %v300, 16
      %v331 = vrot.slane %v329, 1
      %v332 = vor.u32 %v327, %v331
      %v334 = vshrl.u32 %v301, 16
      %v336 = vshll.u32 %v301, 16
      %v338 = vrot.slane %v336, 1
      %v339 = vor.u32 %v334, %v338
      %v341 = vshrl.u32 %v302, 16
      %v343 = vshll.u32 %v302, 16
      %v345 = vrot.slane %v343, 1
      %v346 = vor.u32 %v341, %v345
      %v348 = vshrl.u32 %v303, 16
      %v350 = vshll.u32 %v303, 16
      %v352 = vrot.slane %v350, 1
      %v353 = vor.u32 %v348, %v352
      %v355 = vshrl.u32 %v304, 16
      %v357 = vshll.u32 %v304, 16
      %v359 = vrot.slane %v357, 1
      %v360 = vor.u32 %v355, %v359
      %361 = vrot.lane.b32.xlu0 %v311, 4
      %v362 = vpop.permute.xlu0 %361
      %363 = vrot.lane.b32.xlu0 %v318, 4
      %v364 = vpop.permute.xlu0 %363
      %365 = vrot.lane.b32.xlu0 %v325, 4
      %v366 = vpop.permute.xlu0 %365
      %367 = vrot.lane.b32.xlu0 %v332, 4
      %v368 = vpop.permute.xlu0 %367
      %369 = vrot.lane.b32.xlu0 %v339, 4
      %v370 = vpop.permute.xlu0 %369
      %371 = vrot.lane.b32.xlu0 %v346, 4
      %v372 = vpop.permute.xlu0 %371
      %373 = vrot.lane.b32.xlu0 %v353, 4
      %v374 = vpop.permute.xlu0 %373
      %375 = vrot.lane.b32.xlu0 %v360, 4
      %v376 = vpop.permute.xlu0 %375
      %v377 = vrot.slane %v297, 1
      %v378 = vrot.slane %v298, 1
      %v379 = vrot.slane %v299, 1
      %v380 = vrot.slane %v300, 1
      %v381 = vrot.slane %v301, 1
      %v382 = vrot.slane %v302, 1
      %v383 = vrot.slane %v303, 1
      %v384 = vrot.slane %v304, 1
      %385 = vrot.lane.b32.xlu0 %v377, 8
      %v386 = vpop.permute.xlu0 %385
      %387 = vrot.lane.b32.xlu0 %v378, 8
      %v388 = vpop.permute.xlu0 %387
      %389 = vrot.lane.b32.xlu0 %v379, 8
      %v390 = vpop.permute.xlu0 %389
      %391 = vrot.lane.b32.xlu0 %v380, 8
      %v392 = vpop.permute.xlu0 %391
      %393 = vrot.lane.b32.xlu0 %v381, 8
      %v394 = vpop.permute.xlu0 %393
      %395 = vrot.lane.b32.xlu0 %v382, 8
      %v396 = vpop.permute.xlu0 %395
      %397 = vrot.lane.b32.xlu0 %v383, 8
      %v398 = vpop.permute.xlu0 %397
      %399 = vrot.lane.b32.xlu0 %v384, 8
      %v400 = vpop.permute.xlu0 %399
      %v417 = vunpack.c.l.b16 %v229
      %v418 = vunpack.c.l.b16 %v230
      %v419 = vunpack.c.l.b16 %v231
      %v420 = vunpack.c.l.b16 %v232
      %v421 = vunpack.c.l.b16 %v233
      %v422 = vunpack.c.l.b16 %v234
      %v423 = vunpack.c.l.b16 %v235
      %v424 = vunpack.c.l.b16 %v236
      %v425 = vunpack.c.l.b16 %v237
      %v426 = vunpack.c.l.b16 %v238
      %v427 = vunpack.c.l.b16 %v239
      %v428 = vunpack.c.l.b16 %v240
      %v429 = vunpack.c.l.b16 %v241
      %v430 = vunpack.c.l.b16 %v242
      %v431 = vunpack.c.l.b16 %v243
      %v432 = vunpack.c.l.b16 %v244
      %v433 = vpack.c.b16 %v418, %v417
      %v434 = vpack.c.b16 %v420, %v419
      %v435 = vpack.c.b16 %v422, %v421
      %v436 = vpack.c.b16 %v424, %v423
      %v437 = vpack.c.b16 %v426, %v425
      %v438 = vpack.c.b16 %v428, %v427
      %v439 = vpack.c.b16 %v430, %v429
      %v440 = vpack.c.b16 %v432, %v431
      %441 = vrot.lane.b32.xlu0 %v433, 12
      %v442 = vpop.permute.xlu0 %441
      %443 = vrot.lane.b32.xlu0 %v434, 12
      %v444 = vpop.permute.xlu0 %443
      %445 = vrot.lane.b32.xlu0 %v435, 12
      %v446 = vpop.permute.xlu0 %445
      %447 = vrot.lane.b32.xlu0 %v436, 12
      %v448 = vpop.permute.xlu0 %447
      %449 = vrot.lane.b32.xlu0 %v437, 12
      %v450 = vpop.permute.xlu0 %449
      %451 = vrot.lane.b32.xlu0 %v438, 12
      %v452 = vpop.permute.xlu0 %451
      %453 = vrot.lane.b32.xlu0 %v439, 12
      %v454 = vpop.permute.xlu0 %453
      %455 = vrot.lane.b32.xlu0 %v440, 12
      %v456 = vpop.permute.xlu0 %455
      %v458 = vshrl.u32 %v433, 16
      %v460 = vshll.u32 %v433, 16
      %v462 = vrot.slane %v460, 1
      %v463 = vor.u32 %v458, %v462
      %v465 = vshrl.u32 %v434, 16
      %v467 = vshll.u32 %v434, 16
      %v469 = vrot.slane %v467, 1
      %v470 = vor.u32 %v465, %v469
      %v472 = vshrl.u32 %v435, 16
      %v474 = vshll.u32 %v435, 16
      %v476 = vrot.slane %v474, 1
      %v477 = vor.u32 %v472, %v476
      %v479 = vshrl.u32 %v436, 16
      %v481 = vshll.u32 %v436, 16
      %v483 = vrot.slane %v481, 1
      %v484 = vor.u32 %v479, %v483
      %v486 = vshrl.u32 %v437, 16
      %v488 = vshll.u32 %v437, 16
      %v490 = vrot.slane %v488, 1
      %v491 = vor.u32 %v486, %v490
      %v493 = vshrl.u32 %v438, 16
      %v495 = vshll.u32 %v438, 16
      %v497 = vrot.slane %v495, 1
      %v498 = vor.u32 %v493, %v497
      %v500 = vshrl.u32 %v439, 16
      %v502 = vshll.u32 %v439, 16
      %v504 = vrot.slane %v502, 1
      %v505 = vor.u32 %v500, %v504
      %v507 = vshrl.u32 %v440, 16
      %v509 = vshll.u32 %v440, 16
      %v511 = vrot.slane %v509, 1
      %v512 = vor.u32 %v507, %v511
      %513 = vrot.lane.b32.xlu0 %v463, 16
      %v514 = vpop.permute.xlu0 %513
      %515 = vrot.lane.b32.xlu0 %v470, 16
      %v516 = vpop.permute.xlu0 %515
      %517 = vrot.lane.b32.xlu0 %v477, 16
      %v518 = vpop.permute.xlu0 %517
      %519 = vrot.lane.b32.xlu0 %v484, 16
      %v520 = vpop.permute.xlu0 %519
      %521 = vrot.lane.b32.xlu0 %v491, 16
      %v522 = vpop.permute.xlu0 %521
      %523 = vrot.lane.b32.xlu0 %v498, 16
      %v524 = vpop.permute.xlu0 %523
      %525 = vrot.lane.b32.xlu0 %v505, 16
      %v526 = vpop.permute.xlu0 %525
      %527 = vrot.lane.b32.xlu0 %v512, 16
      %v528 = vpop.permute.xlu0 %527
      %v529 = vrot.slane %v433, 1
      %v530 = vrot.slane %v434, 1
      %v531 = vrot.slane %v435, 1
      %v532 = vrot.slane %v436, 1
      %v533 = vrot.slane %v437, 1
      %v534 = vrot.slane %v438, 1
      %v535 = vrot.slane %v439, 1
      %v536 = vrot.slane %v440, 1
      %537 = vrot.lane.b32.xlu0 %v529, 20
      %v538 = vpop.permute.xlu0 %537
      %539 = vrot.lane.b32.xlu0 %v530, 20
      %v540 = vpop.permute.xlu0 %539
      %541 = vrot.lane.b32.xlu0 %v531, 20
      %v542 = vpop.permute.xlu0 %541
      %543 = vrot.lane.b32.xlu0 %v532, 20
      %v544 = vpop.permute.xlu0 %543
      %545 = vrot.lane.b32.xlu0 %v533, 20
      %v546 = vpop.permute.xlu0 %545
      %547 = vrot.lane.b32.xlu0 %v534, 20
      %v548 = vpop.permute.xlu0 %547
      %549 = vrot.lane.b32.xlu0 %v535, 20
      %v550 = vpop.permute.xlu0 %549
      %551 = vrot.lane.b32.xlu0 %v536, 20
      %v552 = vpop.permute.xlu0 %551
      %v569 = vunpack.c.l.b16 %v249
      %v570 = vunpack.c.l.b16 %v250
      %v571 = vunpack.c.l.b16 %v251
      %v572 = vunpack.c.l.b16 %v252
      %v573 = vunpack.c.l.b16 %v253
      %v574 = vunpack.c.l.b16 %v254
      %v575 = vunpack.c.l.b16 %v255
      %v576 = vunpack.c.l.b16 %v256
      %v577 = vunpack.c.l.b16 %v257
      %v578 = vunpack.c.l.b16 %v258
      %v579 = vunpack.c.l.b16 %v259
      %v580 = vunpack.c.l.b16 %v260
      %v581 = vunpack.c.l.b16 %v261
      %v582 = vunpack.c.l.b16 %v262
      %v583 = vunpack.c.l.b16 %v263
      %v584 = vunpack.c.l.b16 %v264
      %v585 = vpack.c.b16 %v570, %v569
      %v586 = vpack.c.b16 %v572, %v571
      %v587 = vpack.c.b16 %v574, %v573
      %v588 = vpack.c.b16 %v576, %v575
      %v589 = vpack.c.b16 %v578, %v577
      %v590 = vpack.c.b16 %v580, %v579
      %v591 = vpack.c.b16 %v582, %v581
      %v592 = vpack.c.b16 %v584, %v583
      %593 = vrot.lane.b32.xlu0 %v585, 24
      %v594 = vpop.permute.xlu0 %593
      %595 = vrot.lane.b32.xlu0 %v586, 24
      %v596 = vpop.permute.xlu0 %595
      %597 = vrot.lane.b32.xlu0 %v587, 24
      %v598 = vpop.permute.xlu0 %597
      %599 = vrot.lane.b32.xlu0 %v588, 24
      %v600 = vpop.permute.xlu0 %599
      %601 = vrot.lane.b32.xlu0 %v589, 24
      %v602 = vpop.permute.xlu0 %601
      %603 = vrot.lane.b32.xlu0 %v590, 24
      %v604 = vpop.permute.xlu0 %603
      %605 = vrot.lane.b32.xlu0 %v591, 24
      %v606 = vpop.permute.xlu0 %605
      %607 = vrot.lane.b32.xlu0 %v592, 24
      %v608 = vpop.permute.xlu0 %607
      %v610 = vshrl.u32 %v585, 16
      %v612 = vshll.u32 %v585, 16
      %v614 = vrot.slane %v612, 1
      %v615 = vor.u32 %v610, %v614
      %v617 = vshrl.u32 %v586, 16
      %v619 = vshll.u32 %v586, 16
      %v621 = vrot.slane %v619, 1
      %v622 = vor.u32 %v617, %v621
      %v624 = vshrl.u32 %v587, 16
      %v626 = vshll.u32 %v587, 16
      %v628 = vrot.slane %v626, 1
      %v629 = vor.u32 %v624, %v628
      %v631 = vshrl.u32 %v588, 16
      %v633 = vshll.u32 %v588, 16
      %v635 = vrot.slane %v633, 1
      %v636 = vor.u32 %v631, %v635
      %v638 = vshrl.u32 %v589, 16
      %v640 = vshll.u32 %v589, 16
      %v642 = vrot.slane %v640, 1
      %v643 = vor.u32 %v638, %v642
      %v645 = vshrl.u32 %v590, 16
      %v647 = vshll.u32 %v590, 16
      %v649 = vrot.slane %v647, 1
      %v650 = vor.u32 %v645, %v649
      %v652 = vshrl.u32 %v591, 16
      %v654 = vshll.u32 %v591, 16
      %v656 = vrot.slane %v654, 1
      %v657 = vor.u32 %v652, %v656
      %v659 = vshrl.u32 %v592, 16
      %v661 = vshll.u32 %v592, 16
      %v663 = vrot.slane %v661, 1
      %v664 = vor.u32 %v659, %v663
      %665 = vrot.lane.b32.xlu0 %v615, 28
      %v666 = vpop.permute.xlu0 %665
      %667 = vrot.lane.b32.xlu0 %v622, 28
      %v668 = vpop.permute.xlu0 %667
      %669 = vrot.lane.b32.xlu0 %v629, 28
      %v670 = vpop.permute.xlu0 %669
      %671 = vrot.lane.b32.xlu0 %v636, 28
      %v672 = vpop.permute.xlu0 %671
      %673 = vrot.lane.b32.xlu0 %v643, 28
      %v674 = vpop.permute.xlu0 %673
      %675 = vrot.lane.b32.xlu0 %v650, 28
      %v676 = vpop.permute.xlu0 %675
      %677 = vrot.lane.b32.xlu0 %v657, 28
      %v678 = vpop.permute.xlu0 %677
      %679 = vrot.lane.b32.xlu0 %v664, 28
      %v680 = vpop.permute.xlu0 %679
      %v681 = vrot.slane %v585, 1
      %v682 = vrot.slane %v586, 1
      %v683 = vrot.slane %v587, 1
      %v684 = vrot.slane %v588, 1
      %v685 = vrot.slane %v589, 1
      %v686 = vrot.slane %v590, 1
      %v687 = vrot.slane %v591, 1
      %v688 = vrot.slane %v592, 1
      %689 = vrot.lane.b32.xlu0 %v681, 32
      %v690 = vpop.permute.xlu0 %689
      %691 = vrot.lane.b32.xlu0 %v682, 32
      %v692 = vpop.permute.xlu0 %691
      %693 = vrot.lane.b32.xlu0 %v683, 32
      %v694 = vpop.permute.xlu0 %693
      %695 = vrot.lane.b32.xlu0 %v684, 32
      %v696 = vpop.permute.xlu0 %695
      %697 = vrot.lane.b32.xlu0 %v685, 32
      %v698 = vpop.permute.xlu0 %697
      %699 = vrot.lane.b32.xlu0 %v686, 32
      %v700 = vpop.permute.xlu0 %699
      %701 = vrot.lane.b32.xlu0 %v687, 32
      %v702 = vpop.permute.xlu0 %701
      %703 = vrot.lane.b32.xlu0 %v688, 32
      %v704 = vpop.permute.xlu0 %703
      %vm705 = vcmask 31744
      %v707 = vsel %vm705, %v297, %v362
      %v709 = vsel %vm705, %v298, %v364
      %v711 = vsel %vm705, %v299, %v366
      %v713 = vsel %vm705, %v300, %v368
      %v715 = vsel %vm705, %v301, %v370
      %v717 = vsel %vm705, %v302, %v372
      %v719 = vsel %vm705, %v303, %v374
      %v721 = vsel %vm705, %v304, %v376
      %vm722 = vcmask 64512
      %v724 = vsel %vm722, %v707, %v386
      %v726 = vsel %vm722, %v709, %v388
      %v728 = vsel %vm722, %v711, %v390
      %v730 = vsel %vm722, %v713, %v392
      %v732 = vsel %vm722, %v715, %v394
      %v734 = vsel %vm722, %v717, %v396
      %v736 = vsel %vm722, %v719, %v398
      %v738 = vsel %vm722, %v721, %v400
      %vm739 = vcmask 97280
      %v741 = vsel %vm739, %v724, %v442
      %v743 = vsel %vm739, %v726, %v444
      %v745 = vsel %vm739, %v728, %v446
      %v747 = vsel %vm739, %v730, %v448
      %v749 = vsel %vm739, %v732, %v450
      %v751 = vsel %vm739, %v734, %v452
      %v753 = vsel %vm739, %v736, %v454
      %v755 = vsel %vm739, %v738, %v456
      %vm756 = vcmask 130048
      %v758 = vsel %vm756, %v741, %v514
      %v760 = vsel %vm756, %v743, %v516
      %v762 = vsel %vm756, %v745, %v518
      %v764 = vsel %vm756, %v747, %v520
      %v766 = vsel %vm756, %v749, %v522
      %v768 = vsel %vm756, %v751, %v524
      %v770 = vsel %vm756, %v753, %v526
      %v772 = vsel %vm756, %v755, %v528
      %vm773 = vcmask 162816
      %v775 = vsel %vm773, %v758, %v538
      %v777 = vsel %vm773, %v760, %v540
      %v779 = vsel %vm773, %v762, %v542
      %v781 = vsel %vm773, %v764, %v544
      %v783 = vsel %vm773, %v766, %v546
      %v785 = vsel %vm773, %v768, %v548
      %v787 = vsel %vm773, %v770, %v550
      %v789 = vsel %vm773, %v772, %v552
      %vm790 = vcmask 195584
      %v792 = vsel %vm790, %v775, %v594
      %v794 = vsel %vm790, %v777, %v596
      %v796 = vsel %vm790, %v779, %v598
      %v798 = vsel %vm790, %v781, %v600
      %v800 = vsel %vm790, %v783, %v602
      %v802 = vsel %vm790, %v785, %v604
      %v804 = vsel %vm790, %v787, %v606
      %v806 = vsel %vm790, %v789, %v608
      %vm807 = vcmask 228352
      %v809 = vsel %vm807, %v792, %v666
      %v811 = vsel %vm807, %v794, %v668
      %v813 = vsel %vm807, %v796, %v670
      %v815 = vsel %vm807, %v798, %v672
      %v817 = vsel %vm807, %v800, %v674
      %v819 = vsel %vm807, %v802, %v676
      %v821 = vsel %vm807, %v804, %v678
      %v823 = vsel %vm807, %v806, %v680
      %vm824 = vcmask 261120
      %v826 = vsel %vm824, %v809, %v690
      %v828 = vsel %vm824, %v811, %v692
      %v830 = vsel %vm824, %v813, %v694
      %v832 = vsel %vm824, %v815, %v696
      %v834 = vsel %vm824, %v817, %v698
      %v836 = vsel %vm824, %v819, %v700
      %v838 = vsel %vm824, %v821, %v702
      %v840 = vsel %vm824, %v823, %v704
      %v849 = vrot.slane %v826, 1
      %v850 = vrot.slane %v826, 2
      %v851 = vrot.slane %v826, 3
      %v852 = vrot.slane %v826, 4
      %v853 = vrot.slane %v826, 5
      %v854 = vrot.slane %v826, 6
      %v855 = vrot.slane %v828, 1
      %v856 = vrot.slane %v828, 2
      %v857 = vrot.slane %v828, 3
      %v858 = vrot.slane %v828, 4
      %v859 = vrot.slane %v828, 5
      %v860 = vrot.slane %v828, 6
      %v861 = vrot.slane %v830, 1
      %v862 = vrot.slane %v830, 2
      %v863 = vrot.slane %v830, 3
      %v864 = vrot.slane %v830, 4
      %v865 = vrot.slane %v830, 5
      %v866 = vrot.slane %v830, 6
      %v867 = vrot.slane %v832, 1
      %v868 = vrot.slane %v832, 2
      %v869 = vrot.slane %v832, 3
      %v870 = vrot.slane %v832, 4
      %v871 = vrot.slane %v832, 5
      %v872 = vrot.slane %v832, 6
      %v873 = vrot.slane %v834, 1
      %v874 = vrot.slane %v834, 2
      %v875 = vrot.slane %v834, 3
      %v876 = vrot.slane %v834, 4
      %v877 = vrot.slane %v834, 5
      %v878 = vrot.slane %v834, 6
      %v879 = vrot.slane %v836, 1
      %v880 = vrot.slane %v836, 2
      %v881 = vrot.slane %v836, 3
      %v882 = vrot.slane %v836, 4
      %v883 = vrot.slane %v836, 5
      %v884 = vrot.slane %v836, 6
      %v885 = vrot.slane %v838, 1
      %v886 = vrot.slane %v838, 2
      %v887 = vrot.slane %v838, 3
      %v888 = vrot.slane %v838, 4
      %v889 = vrot.slane %v838, 5
      %v890 = vrot.slane %v838, 6
      %v891 = vrot.slane %v840, 1
      %v892 = vrot.slane %v840, 2
      %v893 = vrot.slane %v840, 3
      %v894 = vrot.slane %v840, 4
      %v895 = vrot.slane %v840, 5
      %v896 = vrot.slane %v840, 6
      %897 = vst [vmem:[#allocation1] ss:$9 sm:$0xff] %v826
      %s899 = scalar_lea.vmem [#allocation1], 1
      %900 = vst [vmem:[%s899] ss:$9 sm:$0xff] %v849
      %s902 = scalar_lea.vmem [#allocation1], 2
      %903 = vst [vmem:[%s902] ss:$9 sm:$0xff] %v850
      %s905 = scalar_lea.vmem [#allocation1], 3
      %906 = vst [vmem:[%s905] ss:$9 sm:$0xff] %v851
      %s908 = scalar_lea.vmem [#allocation1], 4
      %909 = vst [vmem:[%s908] ss:$9 sm:$0xff] %v852
      %s911 = scalar_lea.vmem [#allocation1], 5
      %912 = vst [vmem:[%s911] ss:$9 sm:$0xff] %v853
      %s914 = scalar_lea.vmem [#allocation1], 6
      %915 = vst [vmem:[%s914] ss:$9 sm:$0xff] %v854
      %s916 = scalar_lea.vmem [#allocation1], 7
      %917 = vst [vmem:[%s916] ss:$9 sm:$0xff] %v828
      %v918 = vld [vmem:[#allocation1] sm:$0xff]
      %920 = vst [vmem:[#allocation1] ss:$9 sm:$0xff] %v855
      %922 = vst [vmem:[%s899] ss:$9 sm:$0xff] %v856
      %924 = vst [vmem:[%s902] ss:$9 sm:$0xff] %v857
      %926 = vst [vmem:[%s905] ss:$9 sm:$0xff] %v858
      %928 = vst [vmem:[%s908] ss:$9 sm:$0xff] %v859
      %930 = vst [vmem:[%s911] ss:$9 sm:$0xff] %v860
      %931 = vst [vmem:[%s914] ss:$9 sm:$0xff] %v830
      %933 = vst [vmem:[%s916] ss:$9 sm:$0xff] %v861
      %v934 = vld [vmem:[#allocation1] sm:$0xff]
      %936 = vst [vmem:[#allocation1] ss:$9 sm:$0xff] %v862
      %938 = vst [vmem:[%s899] ss:$9 sm:$0xff] %v863
      %940 = vst [vmem:[%s902] ss:$9 sm:$0xff] %v864
      %942 = vst [vmem:[%s905] ss:$9 sm:$0xff] %v865
      %944 = vst [vmem:[%s908] ss:$9 sm:$0xff] %v866
      %945 = vst [vmem:[%s911] ss:$9 sm:$0xff] %v832
      %947 = vst [vmem:[%s914] ss:$9 sm:$0xff] %v867
      %949 = vst [vmem:[%s916] ss:$9 sm:$0xff] %v868
      %v950 = vld [vmem:[#allocation1] sm:$0xff]
      %952 = vst [vmem:[#allocation1] ss:$9 sm:$0xff] %v869
      %954 = vst [vmem:[%s899] ss:$9 sm:$0xff] %v870
      %956 = vst [vmem:[%s902] ss:$9 sm:$0xff] %v871
      %958 = vst [vmem:[%s905] ss:$9 sm:$0xff] %v872
      %959 = vst [vmem:[%s908] ss:$9 sm:$0xff] %v834
      %961 = vst [vmem:[%s911] ss:$9 sm:$0xff] %v873
      %963 = vst [vmem:[%s914] ss:$9 sm:$0xff] %v874
      %965 = vst [vmem:[%s916] ss:$9 sm:$0xff] %v875
      %v966 = vld [vmem:[#allocation1] sm:$0xff]
      %968 = vst [vmem:[#allocation1] ss:$9 sm:$0xff] %v876
      %970 = vst [vmem:[%s899] ss:$9 sm:$0xff] %v877
      %972 = vst [vmem:[%s902] ss:$9 sm:$0xff] %v878
      %973 = vst [vmem:[%s905] ss:$9 sm:$0xff] %v836
      %975 = vst [vmem:[%s908] ss:$9 sm:$0xff] %v879
      %977 = vst [vmem:[%s911] ss:$9 sm:$0xff] %v880
      %979 = vst [vmem:[%s914] ss:$9 sm:$0xff] %v881
      %981 = vst [vmem:[%s916] ss:$9 sm:$0xff] %v882
      %v982 = vld [vmem:[#allocation1] sm:$0xff]
      %984 = vst [vmem:[#allocation1] ss:$9 sm:$0xff] %v883
      %986 = vst [vmem:[%s899] ss:$9 sm:$0xff] %v884
      %987 = vst [vmem:[%s902] ss:$9 sm:$0xff] %v838
      %989 = vst [vmem:[%s905] ss:$9 sm:$0xff] %v885
      %991 = vst [vmem:[%s908] ss:$9 sm:$0xff] %v886
      %993 = vst [vmem:[%s911] ss:$9 sm:$0xff] %v887
      %995 = vst [vmem:[%s914] ss:$9 sm:$0xff] %v888
      %997 = vst [vmem:[%s916] ss:$9 sm:$0xff] %v889
      %v998 = vld [vmem:[#allocation1] sm:$0xff]
      %1000 = vst [vmem:[#allocation1] ss:$9 sm:$0xff] %v890
      %1001 = vst [vmem:[%s899] ss:$9 sm:$0xff] %v840
      %1003 = vst [vmem:[%s902] ss:$9 sm:$0xff] %v891
      %1005 = vst [vmem:[%s905] ss:$9 sm:$0xff] %v892
      %1007 = vst [vmem:[%s908] ss:$9 sm:$0xff] %v893
      %1009 = vst [vmem:[%s911] ss:$9 sm:$0xff] %v894
      %1011 = vst [vmem:[%s914] ss:$9 sm:$0xff] %v895
      %1013 = vst [vmem:[%s916] ss:$9 sm:$0xff] %v896
      %v1014 = vld [vmem:[#allocation1] sm:$0xff]
      %v1020 = vunpack.c.l.b16 %v201
      %v1021 = vunpack.c.l.b16 %v202
      %v1022 = vunpack.c.l.b16 %v203
      %v1023 = vunpack.c.l.b16 %v204
      %v1024 = vunpack.c.l.b16 %v205
      %v1025 = vpack.c.b16 %v1021, %v1020
      %v1026 = vpack.c.b16 %v1023, %v1022
      %v1027 = vpack.c.b16 %v1024, %v1024
      %vm1030 = vcmask 293888
      %v1031 = vsel %vm1030, %v918, 0
      %v1033 = vsel %vm1030, %v934, 0
      %v1035 = vsel %vm1030, %v950, 0
      %v1037 = vsel %vm1030, %v966, 0
      %v1039 = vsel %vm1030, %v982, 0
      %v1041 = vsel %vm1030, %v998, 0
      %v1043 = vsel %vm1030, %v1014, 0
      %vm1045 = vcmask 1041408
      %v1047 = vsel %vm1045, %v1027, 0
      %1049 = vmatpush.bf16.msra.mxu0 0
      %1050 = vmatpush.bf16.msra.mxu0 0
      %1051 = vmatpush.bf16.msra.mxu0 0
      %1052 = vmatpush.bf16.msra.mxu0 0
      %1053 = vmatpush.bf16.msra.mxu0 0
      %1054 = vmatpush.bf16.msra.mxu0 %v1047
      %1055 = vmatpush.bf16.msra.mxu0 %v1026
      %1056 = vmatpush.bf16.msra.mxu0 %v1025
      %1057 = vmatmul.bf16.gmra.mxu0 %v1031
      %v1058 = vpop.f32.mrf.mxu0
      %v1059 = vadd.f32 0.0, %v1058
      %v1060 = vpop.f32.mrf.mxu0
      %v1061 = vadd.f32 0.0, %v1060
      %1062 = vmatmul.bf16.gmra.mxu0 %v1033
      %v1063 = vpop.f32.mrf.mxu0
      %v1064 = vadd.f32 0.0, %v1063
      %v1065 = vpop.f32.mrf.mxu0
      %v1066 = vadd.f32 0.0, %v1065
      %1067 = vmatmul.bf16.gmra.mxu0 %v1035
      %v1068 = vpop.f32.mrf.mxu0
      %v1069 = vadd.f32 0.0, %v1068
      %v1070 = vpop.f32.mrf.mxu0
      %v1071 = vadd.f32 0.0, %v1070
      %1072 = vmatmul.bf16.gmra.mxu0 %v1037
      %v1073 = vpop.f32.mrf.mxu0
      %v1074 = vadd.f32 0.0, %v1073
      %v1075 = vpop.f32.mrf.mxu0
      %v1076 = vadd.f32 0.0, %v1075
      %1077 = vmatmul.bf16.gmra.mxu0 %v1039
      %v1078 = vpop.f32.mrf.mxu0
      %v1079 = vadd.f32 0.0, %v1078
      %v1080 = vpop.f32.mrf.mxu0
      %v1081 = vadd.f32 0.0, %v1080
      %1082 = vmatmul.bf16.gmra.mxu0 %v1041
      %v1083 = vpop.f32.mrf.mxu0
      %v1084 = vadd.f32 0.0, %v1083
      %v1085 = vpop.f32.mrf.mxu0
      %v1086 = vadd.f32 0.0, %v1085
      %1087 = vmatmul.bf16.gmra.mxu0 %v1043
      %v1088 = vpop.f32.mrf.mxu0
      %v1089 = vadd.f32 0.0, %v1088
      %v1090 = vpop.f32.mrf.mxu0
      %v1091 = vadd.f32 0.0, %v1090
      %1092 = vdwg.mxu0
      %1093 = vst [vmem:[%s197] sm:$0xff] %v1059
      %1094 = vst [vmem:[%s197 + $0x8] sm:$0xff] %v1061
      %1095 = vst [vmem:[%s197 + $0x10] sm:$0xff] %v1064
      %1096 = vst [vmem:[%s197 + $0x18] sm:$0xff] %v1066
      %1097 = vst [vmem:[%s197 + $0x20] sm:$0xff] %v1069
      %1098 = vst [vmem:[%s197 + $0x28] sm:$0xff] %v1071
      %1099 = vst [vmem:[%s197 + $0x30] sm:$0xff] %v1074
      %1100 = vst [vmem:[%s197 + $0x38] sm:$0xff] %v1076
      %1101 = vst [vmem:[%s197 + $0x40] sm:$0xff] %v1079
      %1102 = vst [vmem:[%s197 + $0x48] sm:$0xff] %v1081
      %1103 = vst [vmem:[%s197 + $0x50] sm:$0xff] %v1084
      %1104 = vst [vmem:[%s197 + $0x58] sm:$0xff] %v1086
      %1105 = vst [vmem:[%s197 + $0x60] sm:$0xff] %v1089
      %1106 = vst [vmem:[%s197 + $0x68] sm:$0xff] %v1091
      %s1107 = smul.u32 14, %s20
      %p1108 = scmp.lt.s32.totalorder %s18, 1
      %s1109 = scalar_select %p1108, %s18, 1
      %p1110 = scmp.lt.s32.totalorder %s1107, 27
      %s1111 = scalar_select %p1110, %s1107, 27
      %p1112 = scmp.lt.s32.totalorder %s19, 0
      %s1113 = scalar_select %p1112, %s19, 0
      %s1114 = sadd.s32 %s1113, %s1111
      %s1115 = smul.addr %s1109, 28
      %s1116 = sadd.s32 %s1114, %s1115
      %s1117 = smul.addr %s1116, 8
      %s1118 = scalar_lea.vmem %s2, %s1117
      // Predicated region
      $region29: #{conv_bin_layer.1} parent=27 // pred_check
        %p1119 = pneg %p106
      $region30: #{conv_bin_layer.1} parent=27 // pred_check_branch
        %1121 = sbr.rel (%p1119) target = $region32
      $region31: #{conv_bin_layer.1} parent=27 // pred_region
        %s1122 = smul.u32 14, %s20
      $region32: #{conv_bin_layer.1} parent=27 // pred_fallthru
        _
    $region28: #{conv_bin_layer.1} parent=5 // pred_fallthru
      _
    %p1123 = scmp.le.s32.totalorder 2, %s8
    // Predicated region
    $region33: #{conv_bin_layer.1} parent=5 // pred_check
      %p1124 = pneg %p1123
    $region34: #{conv_bin_layer.1} parent=5 // pred_check_branch
      %1126 = sbr.rel (%p1124) target = $region36
    $region35: #{conv_bin_layer.1} parent=5 // pred_region
      %s1127 = ssub.s32 %s8, 2
      // Predicated region
      $region37: #{conv_bin_layer.1} parent=35 // pred_check
        %p1128 = pneg %p112
      $region38: #{conv_bin_layer.1} parent=35 // pred_check_branch
        %1130 = sbr.rel (%p1128) target = $region40
      $region39: #{conv_bin_layer.1} parent=35 // pred_region
        %s1131 = smul.u32 14, %s23
        %p1132 = scmp.lt.s32.totalorder %s21, 1
        %s1133 = scalar_select %p1132, %s21, 1
        %p1134 = scmp.lt.s32.totalorder %s1131, 27
        %s1135 = scalar_select %p1134, %s1131, 27
        %p1136 = scmp.lt.s32.totalorder %s22, 0
        %s1137 = scalar_select %p1136, %s22, 0
        %s1138 = sadd.s32 %s1137, %s1135
        %s1139 = smul.addr %s1133, 28
        %s1140 = sadd.s32 %s1138, %s1139
        %s1141 = smul.addr %s1140, 8
        %s1142 = scalar_lea.vmem %s2, %s1141
      $region40: #{conv_bin_layer.1} parent=35 // pred_fallthru
        _
    $region36: #{conv_bin_layer.1} parent=5 // pred_fallthru
      _
  $region6: #{conv_bin_layer.1} parent=0 // loop_footer
    %s12 = sadd.s32 1, %s8
  $region7: #{conv_bin_layer.1} parent=0 // loop_footer_branch
    %7 = sbr.rel target = $region3
  $region8: #{conv_bin_layer.1} parent=0 // loop_exit
    _

</llo_original>
